<compile_context>
chip_gen: v7x
topology: tpu7x:2x2x1
jax: 0.10.0
libtpu: 0.0.40
codegen_flags: <defaults>
</compile_context>

<pallas_src>
import jax
import jax.numpy as jnp
from jax.experimental import pallas as pl
from jax.experimental.pallas import tpu as pltpu


# ------------------------------------------------------------------ kernels


def _channel_mean_f32(x_ref):
    """f32 mean over axis 1 of a (bt, C, HW) block ref.

    For sub-32-bit inputs with C a multiple of the native sublane tile, accumulate the
    channel sum tile-by-tile so the full-block f32 cast never lives as a single value
    (bounds VMEM/vreg pressure; the avoided spill stores matter most on v5e's single
    store port)."""
    bt, C, HW = x_ref.shape
    itemsize = jnp.dtype(x_ref.dtype).itemsize
    sub = 8 * max(1, 4 // itemsize)  # sublanes per native tile: f32->8, bf16->16, int8->32
    if itemsize >= 4 or C % sub != 0 or C <= sub:
        return jnp.mean(x_ref[...].astype(jnp.float32), axis=1, keepdims=True)
    acc = jnp.zeros((bt, 1, HW), jnp.float32)
    for k in range(C // sub):  # static, tile-aligned ref slices (zero-cost views)
        blk = x_ref[:, k * sub:(k + 1) * sub, :].astype(jnp.float32)
        acc = acc + jnp.sum(blk, axis=1, keepdims=True)
    return acc * (1.0 / C)


def _feature_drop_kernel(ratio_ref, x_ref, o_ref):
    """Single-pass kernel: block = (bt, C, HW); ratio is a (1,) f32 scalar in SMEM."""
    att = _channel_mean_f32(x_ref)                       # (bt, 1, HW) f32
    max_val = jnp.max(att, axis=-1, keepdims=True)       # (bt, 1, 1)
    thresh = max_val * ratio_ref[0]
    keep = (att < thresh).astype(o_ref.dtype)            # (bt, 1, HW), broadcasts over C
    o_ref[...] = x_ref[...] * keep                       # x * mask (NaN-propagating)


def _attention_kernel(x_ref, att_ref):
    """Two-pass, pass 1: per-chunk f32 channel mean. Blocks (1, C, chunk) -> (1, 1, chunk)."""
    att_ref[...] = _channel_mean_f32(x_ref)


def _apply_kernel(thresh_ref, att_ref, x_ref, o_ref):
    """Two-pass, pass 2: apply per-batch threshold. thresh_ref: (B,) f32 in SMEM."""
    b = pl.program_id(0)
    keep = (att_ref[...] < thresh_ref[b]).astype(o_ref.dtype)   # (1, 1, chunk)
    o_ref[...] = x_ref[...] * keep


# ------------------------------------------------------------------ tiling heuristics


def _vmem_limit(block_bytes):
    # ~6x block covers 2x in + 2x out double-buffers plus in-kernel f32 temporaries,
    # clamped so small problems don't reserve scoped VMEM they never use.
    return int(min(48 << 20, max(16 << 20, 6 * block_bytes + (4 << 20))))


def _choose_batch_tile(B, per_batch_bytes, target_bytes):
    """Batch-tile size: ~target_bytes per block, divisor of B, and (when B allows)
    >= 4 grid steps so each v7x TensorCore gets >= 2 pipelined steps."""
    bt = int(max(1, min(B, target_bytes // max(per_batch_bytes, 1))))
    if B >= 4:
        bt = max(1, min(bt, B // 4))
    elif B >= 2:
        bt = max(1, min(bt, B // 2))
    while B % bt != 0:
        bt -= 1
    return bt


def _choose_hw_chunk(HW, C, itemsize, target_bytes, max_bytes):
    """Lane-aligned spatial chunk for the two-pass path. Prefers a multiple of 128 that
    divides HW exactly; otherwise returns a multiple of 128 and the grid uses cdiv
    (Pallas pads the boundary block and masks its writes). Returns None if even a
    128-lane chunk would not fit max_bytes."""
    per_lane = C * itemsize
    max_elems = (max_bytes // per_lane) // 128 * 128
    if max_elems < 128:
        return None
    target_elems = min(max(128, (target_bytes // per_lane) // 128 * 128), max_elems)
    best_div, d = 0, 128
    while d <= min(HW, target_elems):
        if HW % d == 0:
            best_div = d
        d += 128
    if best_div:
        return best_div
    return min(target_elems, ((HW + 127) // 128) * 128)


# ------------------------------------------------------------------ pallas_call wrappers


def _single_pass(x2, ratio, bt, itemsize, donate):
    B, C, HW = x2.shape
    block_bytes = bt * C * HW * itemsize
    return pl.pallas_call(
        _feature_drop_kernel,
        out_shape=jax.ShapeDtypeStruct((B, C, HW), x2.dtype),
        grid=(B // bt,),
        in_specs=[
            pl.BlockSpec(memory_space=pltpu.SMEM),            # ratio (1,) scalar
            pl.BlockSpec((bt, C, HW), lambda b: (b, 0, 0)),   # x: bt batches per step
        ],
        out_specs=pl.BlockSpec((bt, C, HW), lambda b: (b, 0, 0)),
        compiler_params=pltpu.CompilerParams(
            dimension_semantics=("parallel",),
            vmem_limit_bytes=_vmem_limit(block_bytes)),
        cost_estimate=pl.CostEstimate(
            flops=3 * B * C * HW, transcendentals=0,
            bytes_accessed=2 * B * C * HW * itemsize),
        input_output_aliases=({1: 0} if donate else {}),
    )(ratio, x2)


def _two_pass(x2, ratio, chunk, itemsize, donate):
    B, C, HW = x2.shape
    n_chunks = pl.cdiv(HW, chunk)
    block_bytes = C * chunk * itemsize

    # Pass 1: f32 channel-mean "attention" map, chunked over HW (both grid axes parallel
    # so B == 1 still feeds both v7x TensorCores).
    att = pl.pallas_call(
        _attention_kernel,
        out_shape=jax.ShapeDtypeStruct((B, 1, HW), jnp.float32),
        grid=(B, n_chunks),
        in_specs=[pl.BlockSpec((1, C, chunk), lambda b, c: (b, 0, c))],
        out_specs=pl.BlockSpec((1, 1, chunk), lambda b, c: (b, 0, c)),
        compiler_params=pltpu.CompilerParams(
            dimension_semantics=("parallel", "parallel"),
            vmem_limit_bytes=_vmem_limit(block_bytes)),
        cost_estimate=pl.CostEstimate(
            flops=B * C * HW, transcendentals=0,
            bytes_accessed=B * C * HW * itemsize + B * HW * 4),
    )(x2)

    # Tiny per-batch reduce + scale (B*HW f32) — plain XLA is fine here.
    thresholds = (jnp.max(att.reshape(B, HW), axis=1) * ratio[0]).astype(jnp.float32)

    # Pass 2: re-read x chunk-by-chunk, apply the per-batch threshold mask.
    out = pl.pallas_call(
        _apply_kernel,
        out_shape=jax.ShapeDtypeStruct((B, C, HW), x2.dtype),
        grid=(B, n_chunks),
        in_specs=[
            pl.BlockSpec(memory_space=pltpu.SMEM),                      # thresholds (B,)
            pl.BlockSpec((1, 1, chunk), lambda b, c: (b, 0, c)),        # attention
            pl.BlockSpec((1, C, chunk), lambda b, c: (b, 0, c)),        # x
        ],
        out_specs=pl.BlockSpec((1, C, chunk), lambda b, c: (b, 0, c)),
        compiler_params=pltpu.CompilerParams(
            dimension_semantics=("parallel", "parallel"),
            vmem_limit_bytes=_vmem_limit(block_bytes)),
        cost_estimate=pl.CostEstimate(
            flops=2 * B * C * HW, transcendentals=0,
            bytes_accessed=2 * B * C * HW * itemsize + B * HW * 4),
        input_output_aliases=({2: 0} if donate else {}),
    )(thresholds, att, x2)
    return out


# ------------------------------------------------------------------ public entry point


def feature_drop_decoder(x, y=None, *, ratio, donate_x=False,
                         target_block_bytes=6 << 20,
                         max_single_pass_block_bytes=8 << 20,
                         small_total_bytes=2 << 20):
    """x: (B, C, H, W) float array. ratio: scalar / (1,)-shaped stand-in for
    np.random.uniform(0.7, 0.9). Returns (dropped_x, y)."""
    B, C, H, W = x.shape
    HW = H * W
    itemsize = jnp.dtype(x.dtype).itemsize
    per_batch = C * HW * itemsize
    total = B * per_batch

    ratio = jnp.asarray(ratio, jnp.float32).reshape((1,))
    # Contiguous (free) reshape so the lane axis is H*W (lane-dense loads/stores).
    # Note: if real workloads have C < 8 (f32) / 16 (bf16), the sublane dim is padded;
    # folding batch into the sublane axis would recover that, but C >= 8 is the common case.
    x2 = x.reshape(B, C, HW)

    chunk = None
    if per_batch > max_single_pass_block_bytes:
        # A single (C, HW) slab would overflow VMEM double-buffering -> two-pass fallback.
        chunk = _choose_hw_chunk(HW, C, itemsize, target_block_bytes,
                                 max_single_pass_block_bytes)
        # TODO(synk): if chunk is None (pathologically large C), masked partial-C tiling
        # would be needed; we fall through to single-pass which may exceed the VMEM limit.
    elif B == 1 and total > small_total_bytes:
        # grid=(1,) = no pipelining and one idle v7x TensorCore. HW-chunked two-pass
        # restores overlap and feeds both cores at ~1.5x HBM traffic (a win on v7x,
        # roughly neutral on single-core v5e/v6e for compute-light blocks).
        c = _choose_hw_chunk(HW, C, itemsize, target_block_bytes,
                             max_single_pass_block_bytes)
        if c is not None and c < HW:
            chunk = c
    # For B in {2, 3} the single-pass grid already gives every core work; the two-pass
    # scheme would only add traffic, so it is not used there.

    if chunk is not None:
        out2 = _two_pass(x2, ratio, chunk, itemsize, donate_x)
    else:
        bt = _choose_batch_tile(B, per_batch, target_block_bytes)
        out2 = _single_pass(x2, ratio, bt, itemsize, donate_x)

    return out2.reshape(B, C, H, W), y


# ------------------------------------------------------------------ reference + test


def _reference(x, ratio):
    xf = x.astype(jnp.float32)
    attention = jnp.mean(xf, axis=1, keepdims=True)                   # (B,1,H,W) f32
    max_val = jnp.max(attention.reshape(x.shape[0], -1), axis=1)      # (B,)
    threshold = (max_val * ratio[0]).reshape(x.shape[0], 1, 1, 1)
    drop_mask = (attention < threshold).astype(x.dtype)
    return x * drop_mask


if __name__ == "__main__":
    key = jax.random.PRNGKey(0)
    kx, kr, ky, kb = jax.random.split(key, 4)

    # Deterministic stand-in for np.random.uniform(0.7, 0.9)
    ratio = jax.random.uniform(kr, (1,), minval=0.7, maxval=0.9, dtype=jnp.float32)

    # 1) Main path: single-pass batched tile.
    B, C, H, W = 2, 4, 16, 16
    x = jax.random.normal(kx, (B, C, H, W), dtype=jnp.float32)
    y = jax.random.normal(ky, (B, C, H, W), dtype=jnp.float32)
    out, y_out = feature_drop_decoder(x, y, ratio=ratio)
    out = jax.block_until_ready(out)
    ref = _reference(x, ratio)
    assert out.shape == x.shape and y_out is y
    assert jnp.allclose(out, ref, atol=1e-5, rtol=1e-5), "single-pass mismatch"

    # 2) Two-pass HW-chunked fallback (forced via a tiny block budget so it runs at
    #    small test shapes).
    out2, _ = feature_drop_decoder(x, None, ratio=ratio,
                                   target_block_bytes=2048,
                                   max_single_pass_block_bytes=2048)
    out2 = jax.block_until_ready(out2)
    assert jnp.allclose(out2, ref, atol=1e-5, rtol=1e-5), "two-pass mismatch"

    # 3) bf16 input with enough channels to take the chunked channel-sum path.
    Bb, Cb = 2, 32
    xb = jax.random.normal(kb, (Bb, Cb, H, W), dtype=jnp.bfloat16)
    outb, _ = feature_drop_decoder(xb, None, ratio=ratio)
    outb = jax.block_until_ready(outb)
    refb = _reference(xb, ratio)
    assert jnp.allclose(outb.astype(jnp.float32), refb.astype(jnp.float32),
                        atol=1e-2, rtol=1e-2), "bf16 mismatch"

    print("KERNEL_OK")
</pallas_src>

<mosaic_0001>
module attributes {stable_mosaic.version = 11 : i64} {
  func.func @_feature_drop_kernel(%arg0: i32, %arg1: memref<1xf32, #tpu.memory_space<smem>>, %arg2: memref<1x4x256xf32, #tpu.memory_space<vmem>>, %arg3: memref<1x4x256xf32, #tpu.memory_space<vmem>>) attributes {dimension_semantics = [#tpu.dimension_semantics<parallel>], iteration_bounds = array<i64: 2>, scalar_prefetch = 0 : i64, scratch_operands = 0 : i64, tpu.core_type = #tpu.core_type<tc>, window_params = [{transform_indices = @transform_0, window_bounds = array<i64: 1>}, {transform_indices = @transform_1, window_bounds = array<i64: 1, 4, 256>}, {transform_indices = @transform_2, window_bounds = array<i64: 1, 4, 256>}]} {
    %c0 = arith.constant 0 : index
    %c0_0 = arith.constant 0 : index
    %c0_1 = arith.constant 0 : index
    %0 = vector.load %arg2[%c0, %c0_0, %c0_1] : memref<1x4x256xf32, #tpu.memory_space<vmem>>, vector<1x4x256xf32>
    %cst = arith.constant dense<0.000000e+00> : vector<1x256xf32>
    %1 = vector.multi_reduction <add>, %0, %cst [1] : vector<1x4x256xf32> to vector<1x256xf32>
    %2 = vector.shape_cast %1 : vector<1x256xf32> to vector<1x1x256xf32>
    %cst_2 = arith.constant 4.000000e+00 : f32
    %3 = vector.broadcast %cst_2 : f32 to vector<1x1x256xf32>
    %4 = arith.divf %2, %3 : vector<1x1x256xf32>
    %cst_3 = arith.constant dense<0xFF800000> : vector<1x1xf32>
    %5 = vector.multi_reduction <maximumf>, %4, %cst_3 [2] : vector<1x1x256xf32> to vector<1x1xf32>
    %6 = vector.shape_cast %5 : vector<1x1xf32> to vector<1x1x1xf32>
    %c0_4 = arith.constant 0 : index
    %7 = memref.load %arg1[%c0_4] : memref<1xf32, #tpu.memory_space<smem>>
    %8 = vector.broadcast %7 : f32 to vector<1x1x1xf32>
    %9 = arith.mulf %6, %8 : vector<1x1x1xf32>
    %10 = vector.broadcast %9 : vector<1x1x1xf32> to vector<1x1x256xf32>
    %11 = arith.cmpf olt, %4, %10 : vector<1x1x256xf32>
    %12 = arith.extui %11 : vector<1x1x256xi1> to vector<1x1x256xi32>
    %13 = arith.sitofp %12 : vector<1x1x256xi32> to vector<1x1x256xf32>
    %c0_5 = arith.constant 0 : index
    %c0_6 = arith.constant 0 : index
    %c0_7 = arith.constant 0 : index
    %14 = vector.load %arg2[%c0_5, %c0_6, %c0_7] : memref<1x4x256xf32, #tpu.memory_space<vmem>>, vector<1x4x256xf32>
    %15 = vector.broadcast %13 : vector<1x1x256xf32> to vector<1x4x256xf32>
    %16 = arith.mulf %14, %15 : vector<1x4x256xf32>
    %c0_8 = arith.constant 0 : index
    %c0_9 = arith.constant 0 : index
    %c0_10 = arith.constant 0 : index
    %17 = vector.load %arg3[%c0_8, %c0_9, %c0_10] : memref<1x4x256xf32, #tpu.memory_space<vmem>>, vector<1x4x256xf32>
    tpu.vector_store %arg3[%c0_8, %c0_9, %c0_10], %16 {strides = array<i32>} : memref<1x4x256xf32, #tpu.memory_space<vmem>>, vector<1x4x256xf32>,
    return
  }
  func.func @transform_0(%arg0: i32) -> i32 {
    %c0_i32 = arith.constant 0 : i32
    %c0_i32_0 = arith.constant 0 : i32
    return %c0_i32 : i32
  }
  func.func @transform_1(%arg0: i32) -> (i32, i32, i32) {
    %c0_i32 = arith.constant 0 : i32
    %c0_i32_0 = arith.constant 0 : i32
    %c0_i32_1 = arith.constant 0 : i32
    return %arg0, %c0_i32, %c0_i32_0 : i32, i32, i32
  }
  func.func @transform_2(%arg0: i32) -> (i32, i32, i32) {
    %c0_i32 = arith.constant 0 : i32
    %c0_i32_0 = arith.constant 0 : i32
    %c0_i32_1 = arith.constant 0 : i32
    return %arg0, %c0_i32, %c0_i32_0 : i32, i32, i32
  }
}

</mosaic_0001>

<llo_original>
// kernel: tpu_custom_call.1
$region0: #{tpu_custom_call.1}
  #allocation0 [shape = 'u32[]', space=smem, size = 0x4, offset = 0x4, fixed_abs, tag = 'smem constant byte address 0x4 - core index']
  #allocation1 [shape = 'u32[144,128]{1,0:T(1,128)}', space=vmem, size = 0x12000, scoped, tag = 'internal scratch']
  #allocation2 [shape = 'f32[1]{0:T(128)S(6)}', space=smem, size = 0x200, scoped, tag = 'scoped memory for tpu_custom_call.1']
  %s0 = inlined_call_operand.<no memory space> [shape: f32[1], index: 0, kind: input, shape index: {}]
  %s1 = inlined_call_operand.hbm [shape: f32[2,4,256], index: 1, kind: input, shape index: {}]
  %s2 = inlined_call_operand.hbm [shape: f32[2,4,256], index: 2, kind: output, shape index: {}]
  %s3 = sld [smem:[#allocation0]]
  $region45: #{tpu_custom_call.1} parent=0
    _
  %s5 = ssub.s32 1, %s3
  %s6 = scalar_select 0, %s5, %s3
  %7 = sst [smem:[#allocation2]] %s0
  $region1: #{tpu_custom_call.1} parent=0
    #allocation3 [shape = 'u8[8192]{0}', space=vmem, size = 0x2000, scoped, tag = 'input window, operand 1']
    #allocation4 [shape = 's32[2]{0}', space=sflag, size = 0x8, scoped, tag = 'scoped memory for tpu_custom_call.1']
    #allocation5 [shape = 's32[2]{0}', space=sflag, size = 0x8, scoped, tag = 'scoped memory for tpu_custom_call.1']
    #allocation6 [shape = 'u8[8192]{0}', space=vmem, size = 0x2000, scoped, tag = 'output window, operand 0']
    %8 = vsyncpa [#allocation4], 0
    %s9 = scalar_lea.sflag [#allocation4], 1
    %10 = vsyncpa %s9, 0
    %11 = vsyncpa [#allocation5], 0
    %s12 = scalar_lea.sflag [#allocation5], 1
    %13 = vsyncpa %s12, 0
    loop: start=0, step=1, limit=4
    $region2: #{tpu_custom_call.1} parent=1 // loop_pre_header
      _
    $region3: #{tpu_custom_call.1} parent=1 // loop_header
      %s15 = sphi 0, %s19
      %p16 = scmp.ge.s32.totalorder %s15, 4
      %s23 = sphi 0, %s23
      %s25 = sphi 0, %s23
      %s26 = sphi 0, %s25
      %s40 = sphi 0, %s26
      %s46 = sphi 0, %s48
      %s49 = sphi 0, %s46
      %s50 = sphi 0, %s49
      %s66 = sphi 0, %s50
      %s72 = sphi 0, %s74
      %s75 = sphi 0, %s72
      %s76 = sphi 0, %s75
      %s92 = sphi 0, %s76
    $region4: #{tpu_custom_call.1} parent=1 // loop_header_branch
      %18 = sbr.rel (%p16) target = $region8
    $region5: #{tpu_custom_call.1} parent=1 // loop_body
      %s20 = ssub.s32 %s15, 1
      %s21 = ssub.s32 %s15, 2
      %s22 = sadd.s32 %s15, 1
      %s24 = sadd.s32 %s23, 1
      %p27 = scmp.eq.s32.totalorder %s15, 1
      %p28 = scmp.ne.s32.totalorder %s23, %s25
      %p29 = scmp.eq.s32.totalorder %s15, 0
      %p30 = por %p28, %p29
      %p31 = scmp.ne.s32.totalorder %s23, %s25
      %p32 = scmp.eq.s32.totalorder %s20, 1
      %p33 = por %p31, %p32
      %p34 = scmp.ne.s32.totalorder %s25, %s26
      %p35 = scmp.eq.s32.totalorder %s20, 0
      %p36 = por %p34, %p35
      %p37 = scmp.ne.s32.totalorder %s25, %s26
      %p38 = scmp.eq.s32.totalorder %s21, 1
      %p39 = por %p37, %p38
      %p41 = scmp.ne.s32.totalorder %s26, %s40
      %p42 = scmp.eq.s32.totalorder %s21, 0
      %p43 = por %p41, %p42
      %s44 = ssub.s32 %s15, %s22
      %p45 = scmp.eq.s32.totalorder %s44, 0
      %s47 = sadd.s32 %s46, 1
      %s48 = scalar_select %p45, %s46, %s47
      %p51 = pneg %p45
      %p52 = scmp.eq.s32.totalorder %s15, 1
      %p53 = por %p51, %p52
      %p54 = scmp.ne.s32.totalorder %s46, %s49
      %p55 = scmp.eq.s32.totalorder %s15, 0
      %p56 = por %p54, %p55
      %p57 = scmp.ne.s32.totalorder %s46, %s49
      %p58 = scmp.eq.s32.totalorder %s20, 1
      %p59 = por %p57, %p58
      %p60 = scmp.ne.s32.totalorder %s49, %s50
      %p61 = scmp.eq.s32.totalorder %s20, 0
      %p62 = por %p60, %p61
      %p63 = scmp.ne.s32.totalorder %s49, %s50
      %p64 = scmp.eq.s32.totalorder %s21, 1
      %p65 = por %p63, %p64
      %p67 = scmp.ne.s32.totalorder %s50, %s66
      %p68 = scmp.eq.s32.totalorder %s21, 0
      %p69 = por %p67, %p68
      %s70 = ssub.s32 %s15, %s22
      %p71 = scmp.eq.s32.totalorder %s70, 0
      %s73 = sadd.s32 %s72, 1
      %s74 = scalar_select %p71, %s72, %s73
      %p77 = pneg %p71
      %p78 = scmp.eq.s32.totalorder %s15, 1
      %p79 = por %p77, %p78
      %p80 = scmp.ne.s32.totalorder %s72, %s75
      %p81 = scmp.eq.s32.totalorder %s15, 0
      %p82 = por %p80, %p81
      %p83 = scmp.ne.s32.totalorder %s72, %s75
      %p84 = scmp.eq.s32.totalorder %s20, 1
      %p85 = por %p83, %p84
      %p86 = scmp.ne.s32.totalorder %s75, %s76
      %p87 = scmp.eq.s32.totalorder %s20, 0
      %p88 = por %p86, %p87
      %p89 = scmp.ne.s32.totalorder %s75, %s76
      %p90 = scmp.eq.s32.totalorder %s21, 1
      %p91 = por %p89, %p90
      %p93 = scmp.ne.s32.totalorder %s76, %s92
      %p94 = scmp.eq.s32.totalorder %s21, 0
      %p95 = por %p93, %p94
      %p96 = scmp.le.s32.totalorder 1, %s15
      %p97 = scmp.lt.s32.totalorder %s15, 3
      %p98 = pnand %p96, %p97
      %p99 = pneg %p98
      // Predicated region
      $region9: #{tpu_custom_call.1} parent=5 // pred_check
        _
      $region10: #{tpu_custom_call.1} parent=5 // pred_check_branch
        %101 = sbr.rel (%p98) target = $region12
      $region11: #{tpu_custom_call.1} parent=5 // pred_region
        %s102 = ssub.s32 %s15, 1
        // Predicated region
        $region13: #{tpu_custom_call.1} parent=11 // pred_check
          %p103 = pneg %p36
        $region14: #{tpu_custom_call.1} parent=11 // pred_check_branch
          %105 = sbr.rel (%p103) target = $region16
        $region15: #{tpu_custom_call.1} parent=11 // pred_region
          _
        $region16: #{tpu_custom_call.1} parent=11 // pred_fallthru
          _
      $region12: #{tpu_custom_call.1} parent=5 // pred_fallthru
        _
      %p106 = scmp.lt.s32.totalorder %s15, 2
      // Predicated region
      $region17: #{tpu_custom_call.1} parent=5 // pred_check
        %p107 = pneg %p106
      $region18: #{tpu_custom_call.1} parent=5 // pred_check_branch
        %109 = sbr.rel (%p107) target = $region20
      $region19: #{tpu_custom_call.1} parent=5 // pred_region
        // Predicated region
        $region21: #{tpu_custom_call.1} parent=19 // pred_check
          %p110 = pneg %p56
        $region22: #{tpu_custom_call.1} parent=19 // pred_check_branch
          %112 = sbr.rel (%p110) target = $region24
        $region23: #{tpu_custom_call.1} parent=19 // pred_region
          %s113 = sand.u32 %s46, 1
          %s114 = scalar_lea.sflag [#allocation4], %s113
          %s115 = sand.u32 %s46, 1
          %s116 = smul.addr %s115, 8
          %s117 = scalar_lea.vmem [#allocation3], %s116
          %s119 = ssub.s32 128, 128
          %120 = vsyncadd %s114, %s119
          %s121 = smul.addr %s15, 2
          %s122 = smul.addr %s121, 64
          %s123 = scalar_lea.hbm %s1, %s122
          %s125 = sshll.u32 %s117, 4
          %s126 = int_to_ptr.vmem [resolvable:$true] %s125
          %128 = dma.hbm_to_vmem [thread:$0]  %s123, 128, %s126, %s114
        $region24: #{tpu_custom_call.1} parent=19 // pred_fallthru
          _
      $region20: #{tpu_custom_call.1} parent=5 // pred_fallthru
        _
      %p129 = scmp.le.s32.totalorder 1, %s15
      %p130 = scmp.lt.s32.totalorder %s15, 3
      %p131 = pnand %p129, %p130
      %p132 = pneg %p131
      // Predicated region
      $region25: #{tpu_custom_call.1} parent=5 // pred_check
        _
      $region26: #{tpu_custom_call.1} parent=5 // pred_check_branch
        %134 = sbr.rel (%p131) target = $region28
      $region27: #{tpu_custom_call.1} parent=5 // pred_region
        %s135 = ssub.s32 %s15, 1
        %s136 = sand.u32 %s49, 1
        %s137 = scalar_lea.sflag [#allocation4], %s136
        %s138 = sand.u32 %s49, 1
        %s139 = smul.addr %s138, 8
        %s140 = scalar_lea.vmem [#allocation3], %s139
        // Predicated region
        $region29: #{tpu_custom_call.1} parent=27 // pred_check
          %p141 = pneg %p62
        $region30: #{tpu_custom_call.1} parent=27 // pred_check_branch
          %143 = sbr.rel (%p141) target = $region32
        $region31: #{tpu_custom_call.1} parent=27 // pred_region
          %144 = dma.done %s137, 128
        $region32: #{tpu_custom_call.1} parent=27 // pred_fallthru
          _
        %p145 = pneg %p36
        %p146 = pneg %p33
        %s147 = sand.u32 %s49, 1
        %s148 = scalar_lea.sflag [#allocation4], %s147
        %s149 = sand.u32 %s49, 1
        %s150 = smul.addr %s149, 8
        %s151 = scalar_lea.vmem [#allocation3], %s150
        %p152 = pneg %p62
        %p153 = pneg %p59
        %p154 = pneg %p88
        %p155 = pneg %p85
        %s156 = sand.u32 %s75, 1
        %s157 = scalar_lea.sflag [#allocation5], %s156
        %s158 = sand.u32 %s75, 1
        %s159 = smul.addr %s158, 8
        %s160 = scalar_lea.vmem [#allocation6], %s159
        %v161 = vld [vmem:[%s140] sm:$0xff]
        %v163 = vcombine.high %v161, %v161
        %vm165 = vcmask 1043456
        %v166 = vsel %vm165, %v161, 0.0
        %v167 = vrot.slane %v166, 4
        %v168 = vadd.f32 %v166, %v167
        %v169 = vrot.slane %v168, 2
        %v170 = vadd.f32 %v168, %v169
        %v171 = vrot.slane %v170, 1
        %v172 = vadd.f32 %v170, %v171
        %v173 = vsel %vm165, %v163, 0.0
        %v174 = vrot.slane %v173, 4
        %v175 = vadd.f32 %v173, %v174
        %v176 = vrot.slane %v175, 2
        %v177 = vadd.f32 %v175, %v176
        %v178 = vrot.slane %v177, 1
        %v179 = vadd.f32 %v177, %v178
        %v180 = vrcp.pop 4.0
        %v181 = vmul.f32 %v172, %v180
        %v182 = vmul.f32 %v179, %v180
        %v183 = vmax.f32 %v181, %v182
        %184 = vmax.xlane.f32.xlu0 %v183
        %v185 = vpop.xlane.xlu0 %184
        %s186 = sld [smem:[#allocation2]]
        %v187 = vstv %s186
        %v188 = vmul.f32 %v185, %v187
        %vm189 = vcmp.lt.f32.partialorder %v181, %v188
        %vm190 = vcmp.lt.f32.partialorder %v182, %v188
        %v191 = vsel %vm189, 1, 0
        %v192 = vsel %vm190, 1, 0
        %v193 = vcvt.s32.f32 %v191
        %v194 = vcvt.s32.f32 %v192
        %v197 = vcombine.low %v193, %v194
        %v199 = vmul.f32 %v161, %v197
        %200 = vst [vmem:[%s160] sm:$0xff] %v199
        %s201 = sand.u32 %s75, 1
        %s202 = scalar_lea.sflag [#allocation5], %s201
        %s203 = sand.u32 %s75, 1
        %s204 = smul.addr %s203, 8
        %s205 = scalar_lea.vmem [#allocation6], %s204
        // Predicated region
        $region33: #{tpu_custom_call.1} parent=27 // pred_check
          %p206 = pneg %p85
        $region34: #{tpu_custom_call.1} parent=27 // pred_check_branch
          %208 = sbr.rel (%p206) target = $region36
        $region35: #{tpu_custom_call.1} parent=27 // pred_region
          %s210 = ssub.s32 128, 128
          %211 = vsyncadd %s202, %s210
          %s212 = smul.addr %s20, 2
          %s213 = smul.addr %s212, 64
          %s214 = scalar_lea.hbm %s2, %s213
          %s216 = sshll.u32 %s205, 4
          %s217 = int_to_ptr.vmem [resolvable:$true] %s216
          %219 = dma.vmem_to_hbm [thread:$0]  %s217, 128, %s214, %s202
        $region36: #{tpu_custom_call.1} parent=27 // pred_fallthru
          _
      $region28: #{tpu_custom_call.1} parent=5 // pred_fallthru
        _
      %p220 = scmp.le.s32.totalorder 2, %s15
      // Predicated region
      $region37: #{tpu_custom_call.1} parent=5 // pred_check
        %p221 = pneg %p220
      $region38: #{tpu_custom_call.1} parent=5 // pred_check_branch
        %223 = sbr.rel (%p221) target = $region40
      $region39: #{tpu_custom_call.1} parent=5 // pred_region
        %s224 = ssub.s32 %s15, 2
        // Predicated region
        $region41: #{tpu_custom_call.1} parent=39 // pred_check
          %p225 = pneg %p91
        $region42: #{tpu_custom_call.1} parent=39 // pred_check_branch
          %227 = sbr.rel (%p225) target = $region44
        $region43: #{tpu_custom_call.1} parent=39 // pred_region
          %s228 = sand.u32 %s76, 1
          %s229 = scalar_lea.sflag [#allocation5], %s228
          %s230 = sand.u32 %s76, 1
          %s231 = smul.addr %s230, 8
          %s232 = scalar_lea.vmem [#allocation6], %s231
          %233 = dma.done %s229, 128
        $region44: #{tpu_custom_call.1} parent=39 // pred_fallthru
          _
      $region40: #{tpu_custom_call.1} parent=5 // pred_fallthru
        _
    $region6: #{tpu_custom_call.1} parent=1 // loop_footer
      %s19 = sadd.s32 1, %s15
    $region7: #{tpu_custom_call.1} parent=1 // loop_footer_branch
      %14 = sbr.rel target = $region3
    $region8: #{tpu_custom_call.1} parent=1 // loop_exit
      _
    %234 = vsyncpa [#allocation4], 1
    %s235 = scalar_lea.sflag [#allocation4], 1
    %236 = vsyncpa %s235, 1
    %237 = vsyncpa [#allocation5], 1
    %s238 = scalar_lea.sflag [#allocation5], 1
    %239 = vsyncpa %s238, 1

</llo_original>
